<compile_context>
chip_gen: v6e
topology: v6e:2x2x1
jax: 0.10.0
libtpu: 0.0.40
codegen_flags: <defaults>
</compile_context>

<pallas_src>
import math
import functools

import jax
import jax.numpy as jnp
from jax import lax
from jax.experimental import pallas as pl
from jax.experimental.pallas import tpu as pltpu


def _murmur_mix(z):
    """murmur3 finalizer: mixes u32 indices into ~uniform u32 bits."""
    z = (z ^ (z >> jnp.uint32(16))) * jnp.uint32(0x85EBCA6B)
    z = (z ^ (z >> jnp.uint32(13))) * jnp.uint32(0xC2B2AE35)
    z = z ^ (z >> jnp.uint32(16))
    return z


def _pe_dropout_kernel(seed_ref, x_ref, pe_ref, o_ref, *,
                       p, training, batch, ts, n_cols):
    # x_ref : (ts, batch*d_model)   pe_ref : (ts, d_model)   o_ref : like x_ref
    x = x_ref[...]
    pe = pe_ref[...].astype(x.dtype)
    # Broadcast pe over the batch axis: x was flattened as (seq, batch, d) ->
    # (seq, batch*d), so pe repeats `batch` times along the lane axis.
    pe_full = jnp.concatenate([pe] * batch, axis=-1) if batch > 1 else pe
    y = x + pe_full

    if training and p > 0.0:
        shape = y.shape
        row_ids = lax.broadcasted_iota(jnp.int32, shape, 0) + pl.program_id(0) * ts
        col_ids = lax.broadcasted_iota(jnp.int32, shape, 1)
        lin = row_ids * n_cols + col_ids                       # global element id
        seed_u = seed_ref[0].astype(jnp.uint32) * jnp.uint32(0x9E3779B9)
        bits = _murmur_mix(lin.astype(jnp.uint32) + seed_u)    # u32 bits
        # Top 23 bits -> exact float32 uniform in [0, 1) (avoids unsigned cmp).
        u = (bits >> jnp.uint32(9)).astype(jnp.int32).astype(jnp.float32) \
            * jnp.float32(1.0 / (1 << 23))
        keep = u >= jnp.float32(p)
        # Single fused multiplier: keep ? 1/(1-p) : 0
        mult = jnp.where(keep,
                         jnp.float32(1.0 / (1.0 - p)),
                         jnp.float32(0.0)).astype(y.dtype)
        y = y * mult

    o_ref[...] = y.astype(o_ref.dtype)


def make_positional_encoding_pe(d_model, max_len=5000, dtype=jnp.float32):
    """Build the `pe` buffer exactly as the PyTorch __init__ does."""
    position = jnp.arange(0, max_len, dtype=jnp.float32)[:, None]          # [max_len, 1]
    div_term = jnp.exp(
        jnp.arange(0, d_model, 2, dtype=jnp.float32) * (-math.log(10000.0) / d_model)
    )                                                                       # [d_model/2]
    angles = position * div_term                                            # [max_len, d_model/2]
    pe = jnp.zeros((max_len, d_model), dtype=jnp.float32)
    pe = pe.at[:, 0::2].set(jnp.sin(angles))
    pe = pe.at[:, 1::2].set(jnp.cos(angles))
    # unsqueeze(0).transpose(0, 1)  ->  [max_len, 1, d_model]
    return pe[:, None, :].astype(dtype)


def _pick_seq_tile(seq_len, row_bytes, target_bytes=2 * 1024 * 1024):
    """~2 MiB x/out blocks, rows a multiple of 8 (or the full seq_len)."""
    ts = max(8, (target_bytes // max(row_bytes, 1)) // 8 * 8)
    return seq_len if ts >= seq_len else ts


def positional_encoding_forward(x, pe, *, p=0.1, training=True, seed=0,
                                force_pallas=False):
    """x: [seq_len, batch, d_model] -> same shape."""
    seq_len, batch, d_model = x.shape
    pe_slice = pe[:seq_len, 0, :].astype(x.dtype)          # [seq_len, d_model]

    apply_dropout = bool(training) and p > 0.0
    if not apply_dropout and not force_pallas:
        # Inference / p==0 fast path: plain fused broadcast add, no kernel launch.
        return x + pe_slice[:, None, :]
    if apply_dropout and p >= 1.0:
        # nn.Dropout(p=1.0) zeroes everything.
        return jnp.zeros_like(x)

    n_cols = batch * d_model
    x2 = x.reshape(seq_len, n_cols)                         # lane-dense layout
    itemsize = jnp.dtype(x.dtype).itemsize
    ts = _pick_seq_tile(seq_len, n_cols * itemsize)
    grid = (pl.cdiv(seq_len, ts),)                          # partial tail handled by Pallas

    kernel = functools.partial(
        _pe_dropout_kernel,
        p=float(p), training=apply_dropout, batch=batch, ts=ts, n_cols=n_cols,
    )
    seed_arr = jnp.array([seed], dtype=jnp.int32)

    out2 = pl.pallas_call(
        kernel,
        out_shape=jax.ShapeDtypeStruct((seq_len, n_cols), x.dtype),
        grid_spec=pltpu.PrefetchScalarGridSpec(
            num_scalar_prefetch=1,
            grid=grid,
            in_specs=[
                pl.BlockSpec((ts, n_cols), lambda i, seed: (i, 0)),
                pl.BlockSpec((ts, d_model), lambda i, seed: (i, 0)),
            ],
            out_specs=pl.BlockSpec((ts, n_cols), lambda i, seed: (i, 0)),
        ),
        compiler_params=pltpu.CompilerParams(
            # Hash PRNG is position-based (order independent) -> safe to shard
            # the sequence grid across TensorCores (v7x megacore win).
            dimension_semantics=("parallel",),
        ),
    )(seed_arr, x2, pe_slice)
    return out2.reshape(seq_len, batch, d_model)


if __name__ == "__main__":
    key = jax.random.PRNGKey(0)

    seq_len, batch, d_model = 8, 2, 32
    max_len = 64  # small synthetic max_len (module default is 5000)
    p = 0.1

    x = jax.random.normal(key, (seq_len, batch, d_model), dtype=jnp.float32)
    pe = make_positional_encoding_pe(d_model, max_len=max_len, dtype=x.dtype)

    # Training path: fused pe-add + inverted dropout in the Pallas kernel.
    y = positional_encoding_forward(x, pe, p=p, training=True, seed=0)
    jax.block_until_ready(y)
    assert y.shape == x.shape and y.dtype == x.dtype

    ref = x + pe[:seq_len]                 # [seq, 1, d] broadcasts over batch
    scale = 1.0 / (1.0 - p)
    dropped = (y == 0.0)
    # Kept elements must equal (x + pe) / (1 - p); dropped elements are exact zeros.
    assert jnp.allclose(jnp.where(dropped, 0.0, y),
                        jnp.where(dropped, 0.0, ref * scale), atol=1e-5), \
        "training-mode kept-element mismatch"
    assert int(dropped.sum()) < dropped.size, "dropout dropped everything at p=0.1"

    # Eval path routed through the kernel (dropout statically off): exact x + pe.
    y_eval_kernel = positional_encoding_forward(x, pe, p=p, training=False,
                                                force_pallas=True)
    jax.block_until_ready(y_eval_kernel)
    assert jnp.allclose(y_eval_kernel, ref, atol=1e-6), "kernel eval-mode mismatch"

    # Eval fast path (kernel bypass) must match too.
    y_eval = positional_encoding_forward(x, pe, p=p, training=False)
    assert jnp.allclose(y_eval, ref, atol=1e-6), "bypass eval-mode mismatch"

    print("KERNEL_OK")
</pallas_src>

<mosaic_0001>
module attributes {stable_mosaic.version = 11 : i64} {
  func.func @_pe_dropout_kernel(%arg0: i32, %arg1: memref<1xi32, #tpu.memory_space<smem>>, %arg2: memref<8x64xf32, #tpu.memory_space<vmem>>, %arg3: memref<8x32xf32, #tpu.memory_space<vmem>>, %arg4: memref<8x64xf32, #tpu.memory_space<vmem>>) attributes {dimension_semantics = [#tpu.dimension_semantics<parallel>], iteration_bounds = array<i64: 1>, scalar_prefetch = 1 : i64, scratch_operands = 0 : i64, tpu.core_type = #tpu.core_type<tc>, window_params = [{transform_indices = @transform_0, window_bounds = array<i64: 8, 64>}, {transform_indices = @transform_1, window_bounds = array<i64: 8, 32>}, {transform_indices = @transform_2, window_bounds = array<i64: 8, 64>}]} {
    %c0 = arith.constant 0 : index
    %c0_0 = arith.constant 0 : index
    %0 = vector.load %arg2[%c0, %c0_0] : memref<8x64xf32, #tpu.memory_space<vmem>>, vector<8x64xf32>
    %c0_1 = arith.constant 0 : index
    %c0_2 = arith.constant 0 : index
    %1 = vector.load %arg3[%c0_1, %c0_2] : memref<8x32xf32, #tpu.memory_space<vmem>>, vector<8x32xf32>
    %2 = tpu.concatenate %1, %1 in 1 : vector<8x32xf32>, vector<8x32xf32> -> vector<8x64xf32>
    %3 = arith.addf %0, %2 : vector<8x64xf32>
    %4 = tpu.iota {dimensions = array<i32: 0>} : vector<8x64xi32>
    %c8_i32 = arith.constant 8 : i32
    %5 = arith.muli %arg0, %c8_i32 : i32
    %6 = vector.broadcast %5 : i32 to vector<8x64xi32>
    %7 = arith.addi %4, %6 : vector<8x64xi32>
    %8 = tpu.iota {dimensions = array<i32: 1>} : vector<8x64xi32>
    %c64_i32 = arith.constant 64 : i32
    %9 = vector.broadcast %c64_i32 : i32 to vector<8x64xi32>
    %10 = arith.muli %7, %9 : vector<8x64xi32>
    %11 = arith.addi %10, %8 : vector<8x64xi32>
    %c0_3 = arith.constant 0 : index
    %12 = memref.load %arg1[%c0_3] : memref<1xi32, #tpu.memory_space<smem>>
    %c-1640531527_i32 = arith.constant -1640531527 : i32
    %13 = arith.muli %12, %c-1640531527_i32 : i32
    %14 = vector.broadcast %13 : i32 to vector<8x64xi32>
    %15 = arith.addi %11, %14 : vector<8x64xi32>
    %c16_i32 = arith.constant 16 : i32
    %16 = vector.broadcast %c16_i32 : i32 to vector<8x64xi32>
    %17 = arith.shrui %15, %16 : vector<8x64xi32>
    %18 = arith.xori %15, %17 : vector<8x64xi32>
    %c-2048144789_i32 = arith.constant -2048144789 : i32
    %19 = vector.broadcast %c-2048144789_i32 : i32 to vector<8x64xi32>
    %20 = arith.muli %18, %19 : vector<8x64xi32>
    %c13_i32 = arith.constant 13 : i32
    %21 = vector.broadcast %c13_i32 : i32 to vector<8x64xi32>
    %22 = arith.shrui %20, %21 : vector<8x64xi32>
    %23 = arith.xori %20, %22 : vector<8x64xi32>
    %c-1028477387_i32 = arith.constant -1028477387 : i32
    %24 = vector.broadcast %c-1028477387_i32 : i32 to vector<8x64xi32>
    %25 = arith.muli %23, %24 : vector<8x64xi32>
    %c16_i32_4 = arith.constant 16 : i32
    %26 = vector.broadcast %c16_i32_4 : i32 to vector<8x64xi32>
    %27 = arith.shrui %25, %26 : vector<8x64xi32>
    %28 = arith.xori %25, %27 : vector<8x64xi32>
    %c9_i32 = arith.constant 9 : i32
    %29 = vector.broadcast %c9_i32 : i32 to vector<8x64xi32>
    %30 = arith.shrui %28, %29 : vector<8x64xi32>
    %31 = arith.sitofp %30 : vector<8x64xi32> to vector<8x64xf32>
    %cst = arith.constant 1.1920929E-7 : f32
    %32 = vector.broadcast %cst : f32 to vector<8x64xf32>
    %33 = arith.mulf %31, %32 : vector<8x64xf32>
    %cst_5 = arith.constant 1.000000e-01 : f32
    %34 = vector.broadcast %cst_5 : f32 to vector<8x64xf32>
    %35 = arith.cmpf oge, %33, %34 : vector<8x64xf32>
    %cst_6 = arith.constant 1.11111116 : f32
    %cst_7 = arith.constant 0.000000e+00 : f32
    %36 = vector.broadcast %cst_6 : f32 to vector<8x64xf32>
    %37 = vector.broadcast %cst_7 : f32 to vector<8x64xf32>
    %38 = arith.select %35, %36, %37 : vector<8x64xi1>, vector<8x64xf32>
    %39 = arith.mulf %3, %38 : vector<8x64xf32>
    %c0_8 = arith.constant 0 : index
    %c0_9 = arith.constant 0 : index
    %40 = vector.load %arg4[%c0_8, %c0_9] : memref<8x64xf32, #tpu.memory_space<vmem>>, vector<8x64xf32>
    tpu.vector_store %arg4[%c0_8, %c0_9], %39 {strides = array<i32>} : memref<8x64xf32, #tpu.memory_space<vmem>>, vector<8x64xf32>,
    return
  }
  func.func @transform_0(%arg0: i32, %arg1: memref<1xi32, #tpu.memory_space<smem>>) -> (i32, i32) {
    %c0_i32 = arith.constant 0 : i32
    %c0_i32_0 = arith.constant 0 : i32
    return %arg0, %c0_i32 : i32, i32
  }
  func.func @transform_1(%arg0: i32, %arg1: memref<1xi32, #tpu.memory_space<smem>>) -> (i32, i32) {
    %c0_i32 = arith.constant 0 : i32
    %c0_i32_0 = arith.constant 0 : i32
    return %arg0, %c0_i32 : i32, i32
  }
  func.func @transform_2(%arg0: i32, %arg1: memref<1xi32, #tpu.memory_space<smem>>) -> (i32, i32) {
    %c0_i32 = arith.constant 0 : i32
    %c0_i32_0 = arith.constant 0 : i32
    return %arg0, %c0_i32 : i32, i32
  }
}

</mosaic_0001>

<llo_original>
// kernel: tpu_custom_call.1
$region0: #{tpu_custom_call.1}
  #allocation0 [shape = 'u32[]', space=smem, size = 0x4, offset = 0x4, fixed_abs, tag = 'smem constant byte address 0x4 - core index']
  #allocation1 [shape = 'u32[144,128]{1,0:T(1,128)}', space=vmem, size = 0x12000, scoped, tag = 'internal scratch']
  #allocation2 [shape = 's32[1]{0}', space=sflag, size = 0x4, scoped, tag = 'scoped memory for tpu_custom_call.1']
  #allocation3 [shape = 's32[1]{0:T(128)S(6)}', space=smem, size = 0x200, scoped, tag = 'prefetched SMEM operand 0']
  %s0 = inlined_call_operand.<no memory space> [shape: s32[1], index: 0, kind: input, shape index: {}]
  %s1 = inlined_call_operand.hbm [shape: f32[8,64], index: 1, kind: input, shape index: {}]
  %s2 = inlined_call_operand.hbm [shape: f32[8,32], index: 2, kind: input, shape index: {}]
  %s3 = inlined_call_operand.hbm [shape: f32[8,64], index: 3, kind: output, shape index: {}]
  %s4 = sld [smem:[#allocation0]]
  $region26: #{tpu_custom_call.1} parent=0
    _
  %s6 = ssub.s32 1, %s4
  %s7 = scalar_select 0, %s6, %s4
  %8 = sst [smem:[#allocation3]] %s0
  $region1: #{tpu_custom_call.1} parent=0
    #allocation4 [shape = 'u8[4096]{0}', space=vmem, size = 0x1000, scoped, tag = 'input window, operand 1, single buffered']
    #allocation5 [shape = 's32[1]{0}', space=sflag, size = 0x4, scoped, tag = 'scoped memory for tpu_custom_call.1']
    #allocation6 [shape = 's32[1]{0}', space=sflag, size = 0x4, scoped, tag = 'scoped memory for tpu_custom_call.1']
    #allocation7 [shape = 'u8[4096]{0}', space=vmem, size = 0x1000, scoped, tag = 'input window, operand 2, single buffered']
    #allocation8 [shape = 's32[1]{0}', space=sflag, size = 0x4, scoped, tag = 'scoped memory for tpu_custom_call.1']
    #allocation9 [shape = 'u8[4096]{0}', space=vmem, size = 0x1000, scoped, tag = 'output window, operand 0, single buffered']
    %9 = vsyncpa [#allocation5], 0
    %10 = vsyncpa [#allocation8], 0
    %11 = vsyncpa [#allocation6], 0
    // Predicated region
    $region2: #{tpu_custom_call.1} parent=1 // pred_check
      _
    $region3: #{tpu_custom_call.1} parent=1 // pred_check_branch
      %13 = sbr.rel (0) target = $region5
    $region4: #{tpu_custom_call.1} parent=1 // pred_region
      %s15 = ssub.s32 128, 128
      %16 = vsyncadd [#allocation5], %s15
      %s18 = sshll.u32 [#allocation4], 4
      %s19 = int_to_ptr.vmem [resolvable:$true] %s18
      %21 = dma.hbm_to_vmem [thread:$0]  %s1, 128, %s19, [#allocation5]
    $region5: #{tpu_custom_call.1} parent=1 // pred_fallthru
      _
    // Predicated region
    $region6: #{tpu_custom_call.1} parent=1 // pred_check
      _
    $region7: #{tpu_custom_call.1} parent=1 // pred_check_branch
      %23 = sbr.rel (0) target = $region9
    $region8: #{tpu_custom_call.1} parent=1 // pred_region
      %s25 = ssub.s32 128, 128
      %26 = vsyncadd [#allocation8], %s25
      %s28 = sshll.u32 [#allocation7], 4
      %s29 = int_to_ptr.vmem [resolvable:$true] %s28
      %31 = dma.hbm_to_vmem [thread:$0]  %s2, 128, %s29, [#allocation8]
    $region9: #{tpu_custom_call.1} parent=1 // pred_fallthru
      _
    // Predicated region
    $region10: #{tpu_custom_call.1} parent=1 // pred_check
      _
    $region11: #{tpu_custom_call.1} parent=1 // pred_check_branch
      %33 = sbr.rel (0) target = $region13
    $region12: #{tpu_custom_call.1} parent=1 // pred_region
      %34 = dma.done [#allocation5], 128
    $region13: #{tpu_custom_call.1} parent=1 // pred_fallthru
      _
    // Predicated region
    $region14: #{tpu_custom_call.1} parent=1 // pred_check
      _
    $region15: #{tpu_custom_call.1} parent=1 // pred_check_branch
      %36 = sbr.rel (0) target = $region17
    $region16: #{tpu_custom_call.1} parent=1 // pred_region
      %37 = dma.done [#allocation8], 128
    $region17: #{tpu_custom_call.1} parent=1 // pred_fallthru
      _
    %v38 = vld [vmem:[#allocation4] sm:$0xff]
    %v39 = vld [vmem:[#allocation7] sm:$0xff]
    %41 = vrot.lane.b32.xlu0 %v39, 32
    %v42 = vpop.permute.xlu0 %41
    %vm44 = vcmask 261120
    %v45 = vsel %vm44, %v39, %v42
    %v46 = vadd.f32 %v38, %v45
    %v47 = vlaneseq
    %v48 = vshrl.u32 %v47, 7
    %s49 = smul.u32 0, 8
    %v50 = vstv %s49
    %v51 = vadd.s32 %v48, %v50
    %v52 = vlaneseq
    %v53 = vand.u32 %v52, 127
    %v54 = vmul.u32 %v51, 64
    %v55 = vadd.s32 %v54, %v53
    %s56 = sld [smem:[#allocation3]]
    %s57 = smul.u32 %s56, 2654435769
    %v58 = vstv %s57
    %v59 = vadd.s32 %v55, %v58
    %v60 = vshrl.u32 %v59, 16
    %v61 = vxor.u32 %v59, %v60
    %v62 = vmul.u32 %v61, 2246822507
    %v63 = vshrl.u32 %v62, 13
    %v64 = vxor.u32 %v62, %v63
    %v65 = vmul.u32 %v64, 3266489909
    %v66 = vshrl.u32 %v65, 16
    %v67 = vxor.u32 %v65, %v66
    %v68 = vshrl.u32 %v67, 9
    %v69 = vcvt.s32.f32 %v68
    %v70 = vmul.f32 %v69, 1.1920929e-07
    %vm71 = vcmp.ge.f32.partialorder %v70, 0.1
    %v72 = vsel %vm71, 1.1111112, 0.0
    %v73 = vmul.f32 %v46, %v72
    %vm74 = vcmask 523264
    %75 = vst.msk [vmem:[#allocation9] sm:$0xff] %vm74, %v73
    // Predicated region
    $region18: #{tpu_custom_call.1} parent=1 // pred_check
      _
    $region19: #{tpu_custom_call.1} parent=1 // pred_check_branch
      %77 = sbr.rel (0) target = $region21
    $region20: #{tpu_custom_call.1} parent=1 // pred_region
      %s79 = ssub.s32 128, 128
      %80 = vsyncadd [#allocation6], %s79
      %s82 = sshll.u32 [#allocation9], 4
      %s83 = int_to_ptr.vmem [resolvable:$true] %s82
      %85 = dma.vmem_to_hbm [thread:$0]  %s83, 128, %s3, [#allocation6]
    $region21: #{tpu_custom_call.1} parent=1 // pred_fallthru
      _
    // Predicated region
    $region22: #{tpu_custom_call.1} parent=1 // pred_check
      _
    $region23: #{tpu_custom_call.1} parent=1 // pred_check_branch
      %87 = sbr.rel (0) target = $region25
    $region24: #{tpu_custom_call.1} parent=1 // pred_region
      %88 = dma.done [#allocation6], 128
    $region25: #{tpu_custom_call.1} parent=1 // pred_fallthru
      _
    %89 = vsyncpa [#allocation5], 1
    %90 = vsyncpa [#allocation8], 1
    %91 = vsyncpa [#allocation6], 1

</llo_original>
